<compile_context>
chip_gen: v6e
topology: v6e:2x2x1
jax: 0.10.0
libtpu: 0.0.40
codegen_flags: <defaults>
</compile_context>

<pallas_src>
import jax
import jax.numpy as jnp
from jax.experimental import pallas as pl
from jax.experimental.pallas import tpu as pltpu


# ----------------------------------------------------------------------------
# Module-equivalent forward: the reference forward() is `pass`.
# ----------------------------------------------------------------------------
def graph_encoder_forward(x):
    """Pallas/JAX equivalent of GraphEncoder.forward.

    The PyTorch forward body is `pass`, i.e. it performs no compute and
    returns None.  The correct (and fastest) equivalent is to do nothing.
    """
    # TODO(synk): forward() has no body; returning None to match the reference
    # exactly. Use `identity_passthrough` below if a tensor output is needed.
    del x
    return None


# ----------------------------------------------------------------------------
# Optional Pallas identity passthrough (lane-dense, aliased, byte-sized tiles).
# ----------------------------------------------------------------------------
def _identity_kernel(x_ref, o_ref):
    # Per-tile copy through VMEM; pipelined by BlockSpec double-buffering.
    o_ref[...] = x_ref[...]


# ~4 MiB per tile buffer: 4 live buffers (in+out, x2 double-buffer) ~= 16 MiB,
# comfortably under v7x's 32 MiB scoped-VMEM default; at the measured HBM-copy
# roofline knee (>=85% of peak) on all generations.
_TARGET_TILE_BYTES = 4 * 1024 * 1024


def _passthrough_impl(x):
    shape, dtype = x.shape, x.dtype
    itemsize = jnp.dtype(dtype).itemsize

    total = 1
    for d in shape:
        total *= d

    # Empty tensors: nothing to copy (also avoids a zero-extent grid).
    if total == 0:
        return x

    # Pick the widest lane (multiple of 128) such that rows % 8 == 0.
    lane = None
    for cand in (1024, 512, 256, 128):
        if total % (cand * 8) == 0:
            lane = cand
            break
    if lane is None:
        # Unaligned total: a pad + slice would roughly triple HBM traffic for a
        # pure passthrough, so just hand the buffer back untouched.
        return x

    rows = total // lane
    flat = x.reshape(rows, lane)

    # Byte-based tile sizing (multiple of 8 rows), capped at the whole array.
    tile_rows = (_TARGET_TILE_BYTES // (lane * itemsize)) // 8 * 8
    tile_rows = min(rows, max(8, tile_rows))
    grid_n = pl.cdiv(rows, tile_rows)

    # Guarantee >= 2 grid steps when possible so the "parallel" axis can be
    # split across the 2 TensorCores on v7x (no-op on v5e/v6e).
    if grid_n < 2 and rows >= 16:
        tile_rows = ((rows // 2 + 7) // 8) * 8
        grid_n = pl.cdiv(rows, tile_rows)

    out = pl.pallas_call(
        _identity_kernel,
        out_shape=jax.ShapeDtypeStruct((rows, lane), dtype),
        grid=(grid_n,),
        in_specs=[pl.BlockSpec((tile_rows, lane), lambda i: (i, 0))],
        out_specs=pl.BlockSpec((tile_rows, lane), lambda i: (i, 0)),
        input_output_aliases={0: 0},
        compiler_params=pltpu.CompilerParams(
            dimension_semantics=("parallel",)),
        cost_estimate=pl.CostEstimate(
            flops=0,
            transcendentals=0,
            bytes_accessed=2 * rows * lane * itemsize),
    )(flat)

    return out.reshape(shape)


# jit + donated input: the reshape fuses away and input_output_aliases really
# aliases the caller's HBM buffer (no defensive copy, no second buffer).
identity_passthrough = jax.jit(_passthrough_impl, donate_argnums=(0,))


if __name__ == "__main__":
    key = jax.random.PRNGKey(0)
    shape, dtype = (2, 4, 16, 16), jnp.float32

    x = jax.random.normal(key, shape, dtype=dtype)

    # Module-equivalent forward: reference forward() returns None.
    y = graph_encoder_forward(x)
    assert y is None

    # Exercise the Pallas passthrough kernel once (x is donated, so compare
    # against a deterministically regenerated copy).
    z = identity_passthrough(x)
    z = jax.block_until_ready(z)

    x_expected = jax.random.normal(key, shape, dtype=dtype)
    assert z.shape == shape and z.dtype == dtype
    assert bool(jnp.allclose(z, x_expected))

    print("KERNEL_OK")
</pallas_src>

<mosaic_0001>
module attributes {stable_mosaic.version = 11 : i64} {
  func.func @_identity_kernel(%arg0: i32, %arg1: memref<8x256xf32, #tpu.memory_space<vmem>>, %arg2: memref<8x256xf32, #tpu.memory_space<vmem>>) attributes {dimension_semantics = [#tpu.dimension_semantics<parallel>], iteration_bounds = array<i64: 1>, scalar_prefetch = 0 : i64, scratch_operands = 0 : i64, tpu.core_type = #tpu.core_type<tc>, window_params = [{transform_indices = @transform_0, window_bounds = array<i64: 8, 256>}, {transform_indices = @transform_1, window_bounds = array<i64: 8, 256>}]} {
    %c0 = arith.constant 0 : index
    %c0_0 = arith.constant 0 : index
    %0 = vector.load %arg1[%c0, %c0_0] : memref<8x256xf32, #tpu.memory_space<vmem>>, vector<8x256xf32>
    %c0_1 = arith.constant 0 : index
    %c0_2 = arith.constant 0 : index
    %1 = vector.load %arg2[%c0_1, %c0_2] : memref<8x256xf32, #tpu.memory_space<vmem>>, vector<8x256xf32>
    tpu.vector_store %arg2[%c0_1, %c0_2], %0 {strides = array<i32>} : memref<8x256xf32, #tpu.memory_space<vmem>>, vector<8x256xf32>,
    return
  }
  func.func @transform_0(%arg0: i32) -> (i32, i32) {
    %c0_i32 = arith.constant 0 : i32
    %c0_i32_0 = arith.constant 0 : i32
    return %arg0, %c0_i32 : i32, i32
  }
  func.func @transform_1(%arg0: i32) -> (i32, i32) {
    %c0_i32 = arith.constant 0 : i32
    %c0_i32_0 = arith.constant 0 : i32
    return %arg0, %c0_i32 : i32, i32
  }
}

</mosaic_0001>

<llo_original>
// kernel: _passthrough_impl.1
$region0: #{_passthrough_impl.1}
  #allocation0 [shape = 'u32[]', space=smem, size = 0x4, offset = 0x4, fixed_abs, tag = 'smem constant byte address 0x4 - core index']
  #allocation1 [shape = 'u32[144,128]{1,0:T(1,128)}', space=vmem, size = 0x12000, scoped, tag = 'internal scratch']
  %s0 = inlined_call_operand.vmem [shape: f32[8,256], index: 0, kind: input, shape index: {}, may-alias: {0,1}]
  %s1 = inlined_call_operand.vmem [shape: f32[8,256], index: 1, kind: output, shape index: {}, may-alias: {0,1}]
  %s2 = sld [smem:[#allocation0]]
  $region14: #{_passthrough_impl.1} parent=0
    _
  %s4 = ssub.s32 1, %s2
  %s5 = scalar_select 0, %s4, %s2
  // Predicated region
  $region2: #{_passthrough_impl.1} parent=0 // pred_check
    _
  $region3: #{_passthrough_impl.1} parent=0 // pred_check_branch
    %7 = sbr.rel (0) target = $region5
  $region4: #{_passthrough_impl.1} parent=0 // pred_region
    _
  $region5: #{_passthrough_impl.1} parent=0 // pred_fallthru
    _
  %v8 = vld [vmem:[%s0] sm:$0xff]
  %v9 = vld [vmem:[%s0 + $0x8] sm:$0xff]
  %10 = vst [vmem:[%s1] sm:$0xff] %v8
  %11 = vst [vmem:[%s1 + $0x8] sm:$0xff] %v9
  // Predicated region
  $region6: #{_passthrough_impl.1} parent=0 // pred_check
    _
  $region7: #{_passthrough_impl.1} parent=0 // pred_check_branch
    %13 = sbr.rel (0) target = $region9
  $region8: #{_passthrough_impl.1} parent=0 // pred_region
    _
  $region9: #{_passthrough_impl.1} parent=0 // pred_fallthru
    _
  // Predicated region
  $region10: #{_passthrough_impl.1} parent=0 // pred_check
    _
  $region11: #{_passthrough_impl.1} parent=0 // pred_check_branch
    %15 = sbr.rel (0) target = $region13
  $region12: #{_passthrough_impl.1} parent=0 // pred_region
    _
  $region13: #{_passthrough_impl.1} parent=0 // pred_fallthru
    _

</llo_original>
